<compile_context>
chip_gen: v5e
topology: v5e:2x2
jax: 0.10.0
libtpu: 0.0.40
codegen_flags: <defaults>
</compile_context>

<pallas_src>
import functools

import jax
import jax.numpy as jnp
from jax.experimental import pallas as pl
from jax.experimental.pallas import tpu as pltpu


def _head_kernel(x_ref, w1_ref, b1_ref, w2_ref, b2_ref, o_ref):
    # x_ref:  (TN, H)   w1_ref: (H, H)    b1_ref: (1, H)
    # w2_ref: (H, LP)   b2_ref: (1, LP)   o_ref:  (TN, LP)
    x = x_ref[...]
    # dense + bias + tanh  (dropout == identity in eval mode).
    # MXU matmul with f32 accumulation; bias add / tanh stay in f32
    # (EUP tanh is free filler under the MXU, and v5e has no bf16 VPU/EUP).
    h = jnp.dot(x, w1_ref[...], preferred_element_type=jnp.float32) + b1_ref[...]
    h = jnp.tanh(h)
    # out_proj (lane-dense padded output).
    out = jnp.dot(h.astype(w2_ref.dtype), w2_ref[...],
                  preferred_element_type=jnp.float32) + b2_ref[...]
    o_ref[...] = out.astype(o_ref.dtype)


def _round_up(x, m):
    return ((x + m - 1) // m) * m


@functools.partial(jax.jit, static_argnames=("row_tile", "compute_dtype"))
def model_head_forward(features, w_dense, b_dense, w_out, b_out,
                       *, row_tile=512, compute_dtype=None):
    """features: (B, S, H).  Weights pre-transposed to (in, out).

    Returns logits (B, S, num_labels).
    """
    B, S, H = features.shape
    L = w_out.shape[1]
    N = B * S

    # Optional low-precision matmul inputs (accumulation stays f32 in-kernel).
    mm_dtype = compute_dtype if compute_dtype is not None else features.dtype

    x2d = features.reshape(N, H).astype(mm_dtype)
    w1 = w_dense.astype(mm_dtype)
    w2 = w_out.astype(mm_dtype)
    b1 = b_dense.reshape(1, H).astype(jnp.float32)
    b2 = b_out.astype(jnp.float32)

    # --- lane-dense output: pad num_labels up to a multiple of 128 lanes. ---
    LP = _round_up(max(L, 128), 128)
    if LP != L:
        w2 = jnp.zeros((H, LP), dtype=w2.dtype).at[:, :L].set(w2)
        b2 = jnp.zeros((1, LP), dtype=jnp.float32).at[:, :L].set(b2.reshape(1, L))
    else:
        b2 = b2.reshape(1, LP)

    # --- row tiling: tile must be a multiple of 8 sublanes; pad N to tile. ---
    TN = min(row_tile, _round_up(N, 8))
    TN = _round_up(TN, 8)
    NP = _round_up(N, TN)
    if NP != N:
        x2d = jnp.zeros((NP, H), dtype=x2d.dtype).at[:N, :].set(x2d)

    grid = (NP // TN,)

    itemsize = jnp.dtype(mm_dtype).itemsize
    cost = pl.CostEstimate(
        flops=2 * NP * H * (H + LP),
        transcendentals=NP * H,
        bytes_accessed=(NP * H * itemsize            # x
                        + H * H * itemsize           # w_dense (resident)
                        + H * LP * itemsize          # w_out (resident)
                        + (H + LP) * 4               # biases
                        + NP * LP * 4),              # output
    )

    out = pl.pallas_call(
        _head_kernel,
        out_shape=jax.ShapeDtypeStruct((NP, LP), jnp.float32),
        grid=grid,
        in_specs=[
            pl.BlockSpec((TN, H), lambda i: (i, 0)),   # x: one row tile per step
            pl.BlockSpec((H, H), lambda i: (0, 0)),    # w_dense: resident
            pl.BlockSpec((1, H), lambda i: (0, 0)),    # b_dense: resident
            pl.BlockSpec((H, LP), lambda i: (0, 0)),   # w_out (padded): resident
            pl.BlockSpec((1, LP), lambda i: (0, 0)),   # b_out (padded): resident
        ],
        out_specs=pl.BlockSpec((TN, LP), lambda i: (i, 0)),
        compiler_params=pltpu.CompilerParams(
            dimension_semantics=("parallel",),         # shard rows across TCs (v7x)
        ),
        cost_estimate=cost,
    )(x2d, w1, b1, w2, b2)

    # Strip row and label padding, restore (B, S, L) and the input dtype.
    return out[:N, :L].reshape(B, S, L).astype(features.dtype)


def model_head_reference(features, w_dense, b_dense, w_out, b_out):
    h = jnp.tanh(features @ w_dense + b_dense)
    return h @ w_out + b_out


if __name__ == "__main__":
    # Small shapes consistent with the module: hidden_size=32, num_labels=8.
    B, S, H, L = 2, 8, 32, 8

    key = jax.random.PRNGKey(0)
    k_x, k_w1, k_b1, k_w2, k_b2 = jax.random.split(key, 5)

    features = jax.random.normal(k_x, (B, S, H), dtype=jnp.float32)

    # PyTorch stores Linear weight as (out, in); generate (out, in) then
    # transpose to (in, out) for the kernel.
    w_dense_pt = jax.random.normal(k_w1, (H, H), dtype=jnp.float32) * 0.1
    b_dense = jax.random.normal(k_b1, (H,), dtype=jnp.float32) * 0.1
    w_out_pt = jax.random.normal(k_w2, (L, H), dtype=jnp.float32) * 0.1
    b_out = jax.random.normal(k_b2, (L,), dtype=jnp.float32) * 0.1

    w_dense = w_dense_pt.T  # (H, H)
    w_out = w_out_pt.T      # (H, L)

    y_ref = model_head_reference(features, w_dense, b_dense, w_out, b_out)

    # f32 path (bit-accurate vs reference).
    y = model_head_forward(features, w_dense, b_dense, w_out, b_out)
    jax.block_until_ready(y)
    assert y.shape == (B, S, L)
    assert jnp.allclose(y, y_ref, atol=1e-5, rtol=1e-5), "f32 mismatch vs reference"

    # bf16-matmul path (f32 accumulation) — the configuration recommended for
    # realistic hidden sizes; checked with loose tolerance.
    y_bf16 = model_head_forward(features, w_dense, b_dense, w_out, b_out,
                                compute_dtype=jnp.bfloat16)
    jax.block_until_ready(y_bf16)
    assert jnp.allclose(y_bf16, y_ref, atol=0.1, rtol=0.1), "bf16 mismatch vs reference"

    print("KERNEL_OK")
</pallas_src>

<mosaic_0001>
module attributes {stable_mosaic.version = 11 : i64} {
  func.func @_head_kernel(%arg0: i32, %arg1: memref<16x32xf32, #tpu.memory_space<vmem>>, %arg2: memref<32x32xf32, #tpu.memory_space<vmem>>, %arg3: memref<1x32xf32, #tpu.memory_space<vmem>>, %arg4: memref<32x128xf32, #tpu.memory_space<vmem>>, %arg5: memref<1x128xf32, #tpu.memory_space<vmem>>, %arg6: memref<16x128xf32, #tpu.memory_space<vmem>>) attributes {dimension_semantics = [#tpu.dimension_semantics<parallel>], iteration_bounds = array<i64: 1>, scalar_prefetch = 0 : i64, scratch_operands = 0 : i64, tpu.core_type = #tpu.core_type<tc>, window_params = [{transform_indices = @transform_0, window_bounds = array<i64: 16, 32>}, {pipeline_mode = #tpu.pipeline_mode<synchronous>, transform_indices = @transform_1, window_bounds = array<i64: 32, 32>}, {pipeline_mode = #tpu.pipeline_mode<synchronous>, transform_indices = @transform_2, window_bounds = array<i64: 1, 32>}, {pipeline_mode = #tpu.pipeline_mode<synchronous>, transform_indices = @transform_3, window_bounds = array<i64: 32, 128>}, {pipeline_mode = #tpu.pipeline_mode<synchronous>, transform_indices = @transform_4, window_bounds = array<i64: 1, 128>}, {transform_indices = @transform_5, window_bounds = array<i64: 16, 128>}]} {
    %c0 = arith.constant 0 : index
    %c0_0 = arith.constant 0 : index
    %0 = vector.load %arg1[%c0, %c0_0] : memref<16x32xf32, #tpu.memory_space<vmem>>, vector<16x32xf32>
    %c0_1 = arith.constant 0 : index
    %c0_2 = arith.constant 0 : index
    %1 = vector.load %arg2[%c0_1, %c0_2] : memref<32x32xf32, #tpu.memory_space<vmem>>, vector<32x32xf32>
    %cst = arith.constant dense<0.000000e+00> : vector<16x32xf32>
    %2 = tpu.matmul %0, %1, %cst {dimension_numbers = #tpu.dot_dimension_numbers<[1], [0], [0], [1], [0, 0, 1, 1], [], []>} : vector<16x32xf32>, vector<32x32xf32>, vector<16x32xf32> -> vector<16x32xf32>
    %c0_3 = arith.constant 0 : index
    %c0_4 = arith.constant 0 : index
    %3 = vector.load %arg3[%c0_3, %c0_4] : memref<1x32xf32, #tpu.memory_space<vmem>>, vector<1x32xf32>
    %4 = vector.broadcast %3 : vector<1x32xf32> to vector<16x32xf32>
    %5 = arith.addf %2, %4 : vector<16x32xf32>
    %6 = math.tanh %5 : vector<16x32xf32>
    %c0_5 = arith.constant 0 : index
    %c0_6 = arith.constant 0 : index
    %7 = vector.load %arg4[%c0_5, %c0_6] : memref<32x128xf32, #tpu.memory_space<vmem>>, vector<32x128xf32>
    %cst_7 = arith.constant dense<0.000000e+00> : vector<16x128xf32>
    %8 = tpu.matmul %6, %7, %cst_7 {dimension_numbers = #tpu.dot_dimension_numbers<[1], [0], [0], [1], [0, 0, 1, 1], [], []>} : vector<16x32xf32>, vector<32x128xf32>, vector<16x128xf32> -> vector<16x128xf32>
    %c0_8 = arith.constant 0 : index
    %c0_9 = arith.constant 0 : index
    %9 = vector.load %arg5[%c0_8, %c0_9] : memref<1x128xf32, #tpu.memory_space<vmem>>, vector<1x128xf32>
    %10 = vector.broadcast %9 : vector<1x128xf32> to vector<16x128xf32>
    %11 = arith.addf %8, %10 : vector<16x128xf32>
    %c0_10 = arith.constant 0 : index
    %c0_11 = arith.constant 0 : index
    %12 = vector.load %arg6[%c0_10, %c0_11] : memref<16x128xf32, #tpu.memory_space<vmem>>, vector<16x128xf32>
    tpu.vector_store %arg6[%c0_10, %c0_11], %11 {strides = array<i32>} : memref<16x128xf32, #tpu.memory_space<vmem>>, vector<16x128xf32>,
    return
  }
  func.func @transform_0(%arg0: i32) -> (i32, i32) {
    %c0_i32 = arith.constant 0 : i32
    %c0_i32_0 = arith.constant 0 : i32
    return %arg0, %c0_i32 : i32, i32
  }
  func.func @transform_1(%arg0: i32) -> (i32, i32) {
    %c0_i32 = arith.constant 0 : i32
    %c0_i32_0 = arith.constant 0 : i32
    %c0_i32_1 = arith.constant 0 : i32
    return %c0_i32, %c0_i32_0 : i32, i32
  }
  func.func @transform_2(%arg0: i32) -> (i32, i32) {
    %c0_i32 = arith.constant 0 : i32
    %c0_i32_0 = arith.constant 0 : i32
    %c0_i32_1 = arith.constant 0 : i32
    return %c0_i32, %c0_i32_0 : i32, i32
  }
  func.func @transform_3(%arg0: i32) -> (i32, i32) {
    %c0_i32 = arith.constant 0 : i32
    %c0_i32_0 = arith.constant 0 : i32
    %c0_i32_1 = arith.constant 0 : i32
    return %c0_i32, %c0_i32_0 : i32, i32
  }
  func.func @transform_4(%arg0: i32) -> (i32, i32) {
    %c0_i32 = arith.constant 0 : i32
    %c0_i32_0 = arith.constant 0 : i32
    %c0_i32_1 = arith.constant 0 : i32
    return %c0_i32, %c0_i32_0 : i32, i32
  }
  func.func @transform_5(%arg0: i32) -> (i32, i32) {
    %c0_i32 = arith.constant 0 : i32
    %c0_i32_0 = arith.constant 0 : i32
    return %arg0, %c0_i32 : i32, i32
  }
}

</mosaic_0001>

<llo_original>
// kernel: model_head_forward.1
$region0: #{model_head_forward.1}
  #allocation0 [shape = 'u32[]', space=smem, size = 0x4, offset = 0x4, fixed_abs, tag = 'smem constant byte address 0x4 - core index']
  #allocation1 [shape = 'u32[72,128]{1,0:T(1,128)}', space=vmem, size = 0x9000, scoped, tag = 'internal scratch']
  %s0 = inlined_call_operand.vmem [shape: f32[16,32], index: 0, kind: input, shape index: {}]
  %s1 = inlined_call_operand.vmem [shape: f32[32,32], index: 1, kind: input, shape index: {}]
  %s2 = inlined_call_operand.vmem [shape: f32[1,32], index: 2, kind: input, shape index: {}]
  %s3 = inlined_call_operand.vmem [shape: f32[32,128], index: 3, kind: input, shape index: {}]
  %s4 = inlined_call_operand.vmem [shape: f32[1,128], index: 4, kind: input, shape index: {}]
  %s5 = inlined_call_operand.vmem [shape: f32[16,128], index: 5, kind: output, shape index: {}]
  %s6 = sld [smem:[#allocation0]]
  $region30: #{model_head_forward.1} parent=0
    _
  %s8 = ssub.s32 1, %s6
  %s9 = scalar_select 0, %s8, %s6
  // Predicated region
  $region2: #{model_head_forward.1} parent=0 // pred_check
    _
  $region3: #{model_head_forward.1} parent=0 // pred_check_branch
    %11 = sbr.rel (0) target = $region5
  $region4: #{model_head_forward.1} parent=0 // pred_region
    _
  $region5: #{model_head_forward.1} parent=0 // pred_fallthru
    _
  // Predicated region
  $region6: #{model_head_forward.1} parent=0 // pred_check
    _
  $region7: #{model_head_forward.1} parent=0 // pred_check_branch
    %13 = sbr.rel (0) target = $region9
  $region8: #{model_head_forward.1} parent=0 // pred_region
    _
  $region9: #{model_head_forward.1} parent=0 // pred_fallthru
    _
  // Predicated region
  $region10: #{model_head_forward.1} parent=0 // pred_check
    _
  $region11: #{model_head_forward.1} parent=0 // pred_check_branch
    %15 = sbr.rel (0) target = $region13
  $region12: #{model_head_forward.1} parent=0 // pred_region
    _
  $region13: #{model_head_forward.1} parent=0 // pred_fallthru
    _
  // Predicated region
  $region14: #{model_head_forward.1} parent=0 // pred_check
    _
  $region15: #{model_head_forward.1} parent=0 // pred_check_branch
    %17 = sbr.rel (0) target = $region17
  $region16: #{model_head_forward.1} parent=0 // pred_region
    _
  $region17: #{model_head_forward.1} parent=0 // pred_fallthru
    _
  // Predicated region
  $region18: #{model_head_forward.1} parent=0 // pred_check
    _
  $region19: #{model_head_forward.1} parent=0 // pred_check_branch
    %19 = sbr.rel (0) target = $region21
  $region20: #{model_head_forward.1} parent=0 // pred_region
    _
  $region21: #{model_head_forward.1} parent=0 // pred_fallthru
    _
  %v20 = vld [vmem:[%s0] sm:$0xff]
  %v21 = vld [vmem:[%s0 + $0x8] sm:$0xff]
  %v22 = vld [vmem:[%s1] sm:$0xff]
  %v23 = vld [vmem:[%s1 + $0x8] sm:$0xff]
  %v24 = vld [vmem:[%s1 + $0x10] sm:$0xff]
  %v25 = vld [vmem:[%s1 + $0x18] sm:$0xff]
  %v26 = vld [vmem:[%s2] sm:$0x1]
  %v28 = vperm.slane %v26, 0
  %vm30 = vcmask 261120
  %v32 = vsel %vm30, %v20, 0
  %v35 = vsel %vm30, %v21, 0
  %37 = vmatpush.msra.mxu0 0.0
  %38 = vmatpush.msra.mxu0 0.0
  %39 = vmatpush.msra.mxu0 0.0
  %40 = vmatpush.msra.mxu0 0.0
  %41 = vmatpush.msra.mxu0 0.0
  %42 = vmatpush.msra.mxu0 0.0
  %43 = vmatpush.msra.mxu0 0.0
  %44 = vmatpush.msra.mxu0 0.0
  %45 = vmatpush.msra.mxu0 0.0
  %46 = vmatpush.msra.mxu0 0.0
  %47 = vmatpush.msra.mxu0 0.0
  %48 = vmatpush.msra.mxu0 0.0
  %49 = vmatpush.msra.mxu0 %v25
  %50 = vmatpush.msra.mxu0 %v24
  %51 = vmatpush.msra.mxu0 %v23
  %52 = vmatpush.msra.mxu0 %v22
  %53 = vmatmul.f32.gmra.mxu0 %v32
  %v54 = vpop.f32.mrf.mxu0
  %v55 = vadd.f32 %v28, %v54
  %56 = vmatmul.f32.gmra.mxu0 %v35
  %v57 = vpop.f32.mrf.mxu0
  %v58 = vadd.f32 %v28, %v57
  %59 = vdwg.mxu0
  %v60 = vtanh.pop %v55
  %v61 = vtanh.pop %v58
  %v62 = vld [vmem:[%s3] sm:$0xff]
  %v63 = vld [vmem:[%s3 + $0x8] sm:$0xff]
  %v64 = vld [vmem:[%s3 + $0x10] sm:$0xff]
  %v65 = vld [vmem:[%s3 + $0x18] sm:$0xff]
  %v66 = vld [vmem:[%s4] sm:$0x1]
  %v68 = vperm.slane %v66, 0
  %v71 = vsel %vm30, %v60, 0
  %v74 = vsel %vm30, %v61, 0
  %76 = vmatpush.msra.mxu0 0.0
  %77 = vmatpush.msra.mxu0 0.0
  %78 = vmatpush.msra.mxu0 0.0
  %79 = vmatpush.msra.mxu0 0.0
  %80 = vmatpush.msra.mxu0 0.0
  %81 = vmatpush.msra.mxu0 0.0
  %82 = vmatpush.msra.mxu0 0.0
  %83 = vmatpush.msra.mxu0 0.0
  %84 = vmatpush.msra.mxu0 0.0
  %85 = vmatpush.msra.mxu0 0.0
  %86 = vmatpush.msra.mxu0 0.0
  %87 = vmatpush.msra.mxu0 0.0
  %88 = vmatpush.msra.mxu0 %v65
  %89 = vmatpush.msra.mxu0 %v64
  %90 = vmatpush.msra.mxu0 %v63
  %91 = vmatpush.msra.mxu0 %v62
  %92 = vmatmul.f32.gmra.mxu0 %v71
  %v93 = vpop.f32.mrf.mxu0
  %v94 = vadd.f32 %v68, %v93
  %95 = vmatmul.f32.gmra.mxu0 %v74
  %v96 = vpop.f32.mrf.mxu0
  %v97 = vadd.f32 %v68, %v96
  %98 = vdwg.mxu0
  %99 = vst [vmem:[%s5] sm:$0xff] %v94
  %100 = vst [vmem:[%s5 + $0x8] sm:$0xff] %v97
  // Predicated region
  $region22: #{model_head_forward.1} parent=0 // pred_check
    _
  $region23: #{model_head_forward.1} parent=0 // pred_check_branch
    %102 = sbr.rel (0) target = $region25
  $region24: #{model_head_forward.1} parent=0 // pred_region
    _
  $region25: #{model_head_forward.1} parent=0 // pred_fallthru
    _
  // Predicated region
  $region26: #{model_head_forward.1} parent=0 // pred_check
    _
  $region27: #{model_head_forward.1} parent=0 // pred_check_branch
    %104 = sbr.rel (0) target = $region29
  $region28: #{model_head_forward.1} parent=0 // pred_region
    _
  $region29: #{model_head_forward.1} parent=0 // pred_fallthru
    _

</llo_original>
